<compile_context>
chip_gen: v7x
topology: tpu7x:2x2x1
jax: 0.10.0
libtpu: 0.0.40
codegen_flags: <defaults>
</compile_context>

<pallas_src>
import functools

import jax
import jax.numpy as jnp
from jax.experimental import pallas as pl
from jax.experimental.pallas import tpu as pltpu

EPS = 1e-10
_PAD_SENTINEL = 1e30   # ||mu||^2 for padded mixture rows -> exp(-huge) == 0


def _round_up(x, m):
    return (x + m - 1) // m * m


def _heat_kernel(xt_ref, means_ref, mu_sq_ref, o_ref, *, inv_scale):
    # xt_ref:    (Dp, TN)   tile of x^T (batch rows on the lane axis)
    # means_ref: (Mp, Dp)   full padded means matrix, resident every grid step
    # mu_sq_ref: (Mp, 1)    precomputed ||mu||^2 (+ sentinel on padded rows)
    # o_ref:     (1, 1, TN) lane-dense output tile
    xt = xt_ref[...]
    mu = means_ref[...]
    mu_sq = mu_sq_ref[...]

    x_sq = jnp.sum(xt * xt, axis=0, keepdims=True)                   # (1, TN)
    cross = jnp.dot(mu, xt, preferred_element_type=jnp.float32)      # (Mp, TN) MXU

    d2 = jnp.maximum(mu_sq + x_sq - 2.0 * cross, 0.0)                # (Mp, TN)
    dist = jnp.sqrt(d2)                                              # torch.norm(dim=1)
    heat = jnp.exp(-dist * inv_scale)                                # EUP exp
    # TODO(synk): optional per-component `weights` multiply (weights=None in the
    # default module config) would go here as `heat * w_ref[...]`.
    s = jnp.sum(heat, axis=0, keepdims=True)                         # (1, TN)
    o_ref[...] = jnp.log(s + EPS)[None]                              # (1, 1, TN)


def mm_heat_pallas(x, means, var, *, tn=256):
    """x: (N, D), means: (M, D) -> (N,) float32.  `var` must be a static scalar."""
    x = x.astype(jnp.float32)
    means = means.astype(jnp.float32)
    n, d = x.shape
    m, d2 = means.shape
    assert d == d2
    assert tn % 128 == 0, "row tile must be lane-aligned (multiple of 128)"

    # Geometry: lane-align the batch tile and D (zero feature columns don't
    # change ||x - mu||); sublane-align M (multiple of 8 only -- see header).
    tn = min(tn, _round_up(n, 128))          # don't over-pad tiny batches
    n_pad = _round_up(n, tn)
    d_pad = _round_up(d, 128)
    m_pad = _round_up(m, 8)
    n_tiles = n_pad // tn

    # Wrapper-side layout plumbing (one fused XLA pad+transpose over x) and the
    # hoisted ||mu||^2 (was recomputed every grid step in the old kernel).
    x_t = jnp.pad(x, ((0, n_pad - n), (0, d_pad - d))).T              # (Dp, Np)
    means_p = jnp.pad(means, ((0, m_pad - m), (0, d_pad - d)))        # (Mp, Dp)
    mu_sq = jnp.sum(means * means, axis=-1, keepdims=True)            # (M, 1)
    mu_sq_p = jnp.pad(mu_sq, ((0, m_pad - m), (0, 0)),
                      constant_values=_PAD_SENTINEL)                  # (Mp, 1)

    # TODO(synk): if `var` ever needs to be a traced value, pass it as an SMEM
    # scalar instead of baking it into the kernel as a Python float.
    inv_scale = 1.0 / (float(var) * float(m))
    kernel = functools.partial(_heat_kernel, inv_scale=inv_scale)

    # Explicit VMEM budget (v7x: 64 MiB physical / 32 MiB default scope).
    footprint = 4 * (2 * d_pad * tn + 2 * m_pad * d_pad + 2 * m_pad
                     + 2 * tn + 4 * m_pad * tn)
    vmem_limit = int(min(max(4 * footprint, 32 << 20), 48 << 20))

    out = pl.pallas_call(
        kernel,
        out_shape=jax.ShapeDtypeStruct((n_tiles, 1, tn), jnp.float32),
        grid_spec=pltpu.PrefetchScalarGridSpec(
            num_scalar_prefetch=0,
            grid=(n_tiles,),
            in_specs=[
                pl.BlockSpec((d_pad, tn), lambda i: (0, i)),      # x^T tile
                # TODO(synk): for very large M*D, single-buffer the two resident
                # operands below (pl.Buffered(1) / pl.ANY + sync_copy) to halve
                # their VMEM footprint on v7x.
                pl.BlockSpec((m_pad, d_pad), lambda i: (0, 0)),   # means, resident
                pl.BlockSpec((m_pad, 1), lambda i: (0, 0)),       # ||mu||^2, resident
            ],
            out_specs=pl.BlockSpec((1, 1, tn), lambda i: (i, 0, 0)),
        ),
        compiler_params=pltpu.CompilerParams(
            dimension_semantics=("parallel",),
            vmem_limit_bytes=vmem_limit),
    )(x_t, means_p, mu_sq_p)
    return out.reshape(n_pad)[:n]


def mm_heat_reference(x, means, var):
    """Plain-JAX reference mirroring the PyTorch forward."""
    x = x.astype(jnp.float32)
    means = means.astype(jnp.float32)
    m = means.shape[0]
    diff = x[:, None, :] - means[None, :, :]                  # (N, M, D)
    dist = jnp.sqrt(jnp.sum(diff * diff, axis=-1))            # (N, M)
    out = jnp.sum(jnp.exp(-dist * (1.0 / (var * m))), axis=-1)
    return jnp.log(out + EPS)


if __name__ == "__main__":
    key = jax.random.PRNGKey(0)
    kx, km = jax.random.split(key)

    N, D, M = 16, 32, 8          # batch, feature dim (ss_dim-like), num mixture means
    var = 0.5

    x = jax.random.normal(kx, (N, D), dtype=jnp.float32)
    means = jax.random.normal(km, (M, D), dtype=jnp.float32)

    out = mm_heat_pallas(x, means, var)
    out = jax.block_until_ready(out)

    ref = mm_heat_reference(x, means, var)
    assert out.shape == (N,)
    assert jnp.allclose(out, ref, atol=1e-4, rtol=1e-4), (out, ref)

    print("KERNEL_OK")
</pallas_src>

<mosaic_0001>
module attributes {stable_mosaic.version = 11 : i64} {
  func.func @_heat_kernel(%arg0: i32, %arg1: memref<128x128xf32, #tpu.memory_space<vmem>>, %arg2: memref<8x128xf32, #tpu.memory_space<vmem>>, %arg3: memref<8x1xf32, #tpu.memory_space<vmem>>, %arg4: memref<1x1x128xf32, #tpu.memory_space<vmem>>) attributes {dimension_semantics = [#tpu.dimension_semantics<parallel>], iteration_bounds = array<i64: 1>, scalar_prefetch = 0 : i64, scratch_operands = 0 : i64, tpu.core_type = #tpu.core_type<tc>, window_params = [{transform_indices = @transform_0, window_bounds = array<i64: 128, 128>}, {pipeline_mode = #tpu.pipeline_mode<synchronous>, transform_indices = @transform_1, window_bounds = array<i64: 8, 128>}, {pipeline_mode = #tpu.pipeline_mode<synchronous>, transform_indices = @transform_2, window_bounds = array<i64: 8, 1>}, {transform_indices = @transform_3, window_bounds = array<i64: 1, 1, 128>}]} {
    %c0 = arith.constant 0 : index
    %c0_0 = arith.constant 0 : index
    %0 = vector.load %arg1[%c0, %c0_0] : memref<128x128xf32, #tpu.memory_space<vmem>>, vector<128x128xf32>
    %c0_1 = arith.constant 0 : index
    %c0_2 = arith.constant 0 : index
    %1 = vector.load %arg2[%c0_1, %c0_2] : memref<8x128xf32, #tpu.memory_space<vmem>>, vector<8x128xf32>
    %c0_3 = arith.constant 0 : index
    %c0_4 = arith.constant 0 : index
    %2 = vector.load %arg3[%c0_3, %c0_4] : memref<8x1xf32, #tpu.memory_space<vmem>>, vector<8x1xf32>
    %3 = arith.mulf %0, %0 : vector<128x128xf32>
    %cst = arith.constant dense<0.000000e+00> : vector<128xf32>
    %4 = vector.multi_reduction <add>, %3, %cst [0] : vector<128x128xf32> to vector<128xf32>
    %5 = vector.shape_cast %4 : vector<128xf32> to vector<1x128xf32>
    %cst_5 = arith.constant dense<0.000000e+00> : vector<8x128xf32>
    %6 = tpu.matmul %1, %0, %cst_5 {dimension_numbers = #tpu.dot_dimension_numbers<[1], [0], [0], [1], [0, 0, 1, 1], [], []>} : vector<8x128xf32>, vector<128x128xf32>, vector<8x128xf32> -> vector<8x128xf32>
    %7 = vector.broadcast %2 : vector<8x1xf32> to vector<8x128xf32>
    %8 = vector.broadcast %5 : vector<1x128xf32> to vector<8x128xf32>
    %9 = arith.addf %7, %8 : vector<8x128xf32>
    %cst_6 = arith.constant 2.000000e+00 : f32
    %10 = vector.broadcast %cst_6 : f32 to vector<8x128xf32>
    %11 = arith.mulf %10, %6 : vector<8x128xf32>
    %12 = arith.subf %9, %11 : vector<8x128xf32>
    %cst_7 = arith.constant 0.000000e+00 : f32
    %13 = vector.broadcast %cst_7 : f32 to vector<8x128xf32>
    %14 = arith.maximumf %12, %13 : vector<8x128xf32>
    %15 = math.sqrt %14 : vector<8x128xf32>
    %cst_8 = arith.constant 0.000000e+00 : f32
    %16 = vector.broadcast %cst_8 : f32 to vector<8x128xf32>
    %17 = arith.subf %16, %15 : vector<8x128xf32>
    %cst_9 = arith.constant 2.500000e-01 : f32
    %18 = vector.broadcast %cst_9 : f32 to vector<8x128xf32>
    %19 = arith.mulf %17, %18 : vector<8x128xf32>
    %20 = math.exp %19 : vector<8x128xf32>
    %cst_10 = arith.constant dense<0.000000e+00> : vector<128xf32>
    %21 = vector.multi_reduction <add>, %20, %cst_10 [0] : vector<8x128xf32> to vector<128xf32>
    %22 = vector.shape_cast %21 : vector<128xf32> to vector<1x128xf32>
    %cst_11 = arith.constant 1.000000e-10 : f32
    %23 = vector.broadcast %cst_11 : f32 to vector<1x128xf32>
    %24 = arith.addf %22, %23 : vector<1x128xf32>
    %25 = math.log %24 : vector<1x128xf32>
    %26 = vector.shape_cast %25 : vector<1x128xf32> to vector<1x1x128xf32>
    %c0_12 = arith.constant 0 : index
    %c0_13 = arith.constant 0 : index
    %c0_14 = arith.constant 0 : index
    %27 = vector.load %arg4[%c0_12, %c0_13, %c0_14] : memref<1x1x128xf32, #tpu.memory_space<vmem>>, vector<1x1x128xf32>
    tpu.vector_store %arg4[%c0_12, %c0_13, %c0_14], %26 {strides = array<i32>} : memref<1x1x128xf32, #tpu.memory_space<vmem>>, vector<1x1x128xf32>,
    return
  }
  func.func @transform_0(%arg0: i32) -> (i32, i32) {
    %c0_i32 = arith.constant 0 : i32
    %c0_i32_0 = arith.constant 0 : i32
    return %c0_i32, %arg0 : i32, i32
  }
  func.func @transform_1(%arg0: i32) -> (i32, i32) {
    %c0_i32 = arith.constant 0 : i32
    %c0_i32_0 = arith.constant 0 : i32
    %c0_i32_1 = arith.constant 0 : i32
    return %c0_i32, %c0_i32_0 : i32, i32
  }
  func.func @transform_2(%arg0: i32) -> (i32, i32) {
    %c0_i32 = arith.constant 0 : i32
    %c0_i32_0 = arith.constant 0 : i32
    %c0_i32_1 = arith.constant 0 : i32
    return %c0_i32, %c0_i32_0 : i32, i32
  }
  func.func @transform_3(%arg0: i32) -> (i32, i32, i32) {
    %c0_i32 = arith.constant 0 : i32
    %c0_i32_0 = arith.constant 0 : i32
    %c0_i32_1 = arith.constant 0 : i32
    return %arg0, %c0_i32, %c0_i32_0 : i32, i32, i32
  }
}

</mosaic_0001>

<llo_original>
// kernel: tpu_custom_call.1
$region0: #{tpu_custom_call.1}
  #allocation0 [shape = 'u32[]', space=smem, size = 0x4, offset = 0x4, fixed_abs, tag = 'smem constant byte address 0x4 - core index']
  #allocation1 [shape = 'u32[144,128]{1,0:T(1,128)}', space=vmem, size = 0x12000, scoped, tag = 'internal scratch']
  %s0 = inlined_call_operand.hbm [shape: f32[128,128], index: 0, kind: input, shape index: {}]
  %s1 = inlined_call_operand.vmem [shape: f32[8,128], index: 1, kind: input, shape index: {}]
  %s2 = inlined_call_operand.vmem [shape: f32[8,1], index: 2, kind: input, shape index: {}]
  %s3 = inlined_call_operand.hbm [shape: f32[1,1,128], index: 3, kind: output, shape index: {}]
  %s4 = sld [smem:[#allocation0]]
  $region26: #{tpu_custom_call.1} parent=0
    _
  %s6 = ssub.s32 1, %s4
  %s7 = scalar_select 0, %s6, %s4
  $region1: #{tpu_custom_call.1} parent=0
    #allocation2 [shape = 'u8[65536]{0}', space=vmem, size = 0x10000, scoped, tag = 'input window, operand 0, single buffered']
    #allocation3 [shape = 's32[1]{0}', space=sflag, size = 0x4, scoped, tag = 'scoped memory for tpu_custom_call.1']
    #allocation4 [shape = 's32[1]{0}', space=sflag, size = 0x4, scoped, tag = 'scoped memory for tpu_custom_call.1']
    #allocation5 [shape = 'u8[512]{0}', space=vmem, size = 0x400, scoped, tag = 'output window, operand 0, single buffered']
    %8 = vsyncpa [#allocation3], 0
    %9 = vsyncpa [#allocation4], 0
    // Predicated region
    $region2: #{tpu_custom_call.1} parent=1 // pred_check
      _
    $region3: #{tpu_custom_call.1} parent=1 // pred_check_branch
      %11 = sbr.rel (0) target = $region5
    $region4: #{tpu_custom_call.1} parent=1 // pred_region
      %s13 = ssub.s32 2048, 2048
      %14 = vsyncadd [#allocation3], %s13
      %s15 = sshll.u32 [#allocation2], 4
      %s16 = int_to_ptr.vmem [resolvable:$true] %s15
      %21 = dma.hbm_to_vmem [thread:$0]  %s0, 2048, %s16, [#allocation3], 128, 128, 8
    $region5: #{tpu_custom_call.1} parent=1 // pred_fallthru
      _
    // Predicated region
    $region6: #{tpu_custom_call.1} parent=1 // pred_check
      _
    $region7: #{tpu_custom_call.1} parent=1 // pred_check_branch
      %23 = sbr.rel (0) target = $region9
    $region8: #{tpu_custom_call.1} parent=1 // pred_region
      _
    $region9: #{tpu_custom_call.1} parent=1 // pred_fallthru
      _
    // Predicated region
    $region10: #{tpu_custom_call.1} parent=1 // pred_check
      _
    $region11: #{tpu_custom_call.1} parent=1 // pred_check_branch
      %25 = sbr.rel (0) target = $region13
    $region12: #{tpu_custom_call.1} parent=1 // pred_region
      _
    $region13: #{tpu_custom_call.1} parent=1 // pred_fallthru
      _
    // Predicated region
    $region14: #{tpu_custom_call.1} parent=1 // pred_check
      _
    $region15: #{tpu_custom_call.1} parent=1 // pred_check_branch
      %27 = sbr.rel (0) target = $region17
    $region16: #{tpu_custom_call.1} parent=1 // pred_region
      %28 = dma.done [#allocation3], 2048
    $region17: #{tpu_custom_call.1} parent=1 // pred_fallthru
      _
    %v29 = vld [vmem:[#allocation2] sm:$0xff]
    %v30 = vld [vmem:[#allocation2 + $0x8] sm:$0xff]
    %v31 = vld [vmem:[#allocation2 + $0x10] sm:$0xff]
    %v32 = vld [vmem:[#allocation2 + $0x18] sm:$0xff]
    %v33 = vld [vmem:[#allocation2 + $0x20] sm:$0xff]
    %v34 = vld [vmem:[#allocation2 + $0x28] sm:$0xff]
    %v35 = vld [vmem:[#allocation2 + $0x30] sm:$0xff]
    %v36 = vld [vmem:[#allocation2 + $0x38] sm:$0xff]
    %v37 = vld [vmem:[#allocation2 + $0x40] sm:$0xff]
    %v38 = vld [vmem:[#allocation2 + $0x48] sm:$0xff]
    %v39 = vld [vmem:[#allocation2 + $0x50] sm:$0xff]
    %v40 = vld [vmem:[#allocation2 + $0x58] sm:$0xff]
    %v41 = vld [vmem:[#allocation2 + $0x60] sm:$0xff]
    %v42 = vld [vmem:[#allocation2 + $0x68] sm:$0xff]
    %v43 = vld [vmem:[#allocation2 + $0x70] sm:$0xff]
    %v44 = vld [vmem:[#allocation2 + $0x78] sm:$0xff]
    %v45 = vld [vmem:[%s1] sm:$0xff]
    %v46 = vld [vmem:[%s2] sm:$0xff]
    %v47 = vmul.f32 %v29, %v29
    %v48 = vmul.f32 %v30, %v30
    %v49 = vmul.f32 %v31, %v31
    %v50 = vmul.f32 %v32, %v32
    %v51 = vmul.f32 %v33, %v33
    %v52 = vmul.f32 %v34, %v34
    %v53 = vmul.f32 %v35, %v35
    %v54 = vmul.f32 %v36, %v36
    %v55 = vmul.f32 %v37, %v37
    %v56 = vmul.f32 %v38, %v38
    %v57 = vmul.f32 %v39, %v39
    %v58 = vmul.f32 %v40, %v40
    %v59 = vmul.f32 %v41, %v41
    %v60 = vmul.f32 %v42, %v42
    %v61 = vmul.f32 %v43, %v43
    %v62 = vmul.f32 %v44, %v44
    %v63 = vadd.f32 %v47, %v48
    %v64 = vadd.f32 %v63, %v49
    %v65 = vadd.f32 %v64, %v50
    %v66 = vadd.f32 %v65, %v51
    %v67 = vadd.f32 %v66, %v52
    %v68 = vadd.f32 %v67, %v53
    %v69 = vadd.f32 %v68, %v54
    %v70 = vadd.f32 %v69, %v55
    %v71 = vadd.f32 %v70, %v56
    %v72 = vadd.f32 %v71, %v57
    %v73 = vadd.f32 %v72, %v58
    %v74 = vadd.f32 %v73, %v59
    %v75 = vadd.f32 %v74, %v60
    %v76 = vadd.f32 %v75, %v61
    %v77 = vadd.f32 %v76, %v62
    %v78 = vrot.slane %v77, 4
    %v79 = vadd.f32 %v77, %v78
    %v80 = vrot.slane %v79, 2
    %v81 = vadd.f32 %v79, %v80
    %v82 = vrot.slane %v81, 1
    %v83 = vadd.f32 %v81, %v82
    %84 = vmatprep.subr.mxu0 0.0
    %85 = vmatpush1.msra.mxu0 %v29
    %86 = vmatprep.subr.mxu0 0.0
    %87 = vmatpush1.msra.mxu0 %v30
    %88 = vmatprep.subr.mxu0 0.0
    %89 = vmatpush1.msra.mxu0 %v31
    %90 = vmatprep.subr.mxu0 0.0
    %91 = vmatpush1.msra.mxu0 %v32
    %92 = vmatprep.subr.mxu0 0.0
    %93 = vmatpush1.msra.mxu0 %v33
    %94 = vmatprep.subr.mxu0 0.0
    %95 = vmatpush1.msra.mxu0 %v34
    %96 = vmatprep.subr.mxu0 0.0
    %97 = vmatpush1.msra.mxu0 %v35
    %98 = vmatprep.subr.mxu0 0.0
    %99 = vmatpush1.msra.mxu0 %v36
    %100 = vmatprep.subr.mxu0 0.0
    %101 = vmatpush1.msra.mxu0 %v37
    %102 = vmatprep.subr.mxu0 0.0
    %103 = vmatpush1.msra.mxu0 %v38
    %104 = vmatprep.subr.mxu0 0.0
    %105 = vmatpush1.msra.mxu0 %v39
    %106 = vmatprep.subr.mxu0 0.0
    %107 = vmatpush1.msra.mxu0 %v40
    %108 = vmatprep.subr.mxu0 0.0
    %109 = vmatpush1.msra.mxu0 %v41
    %110 = vmatprep.subr.mxu0 0.0
    %111 = vmatpush1.msra.mxu0 %v42
    %112 = vmatprep.subr.mxu0 0.0
    %113 = vmatpush1.msra.mxu0 %v43
    %114 = vmatprep.subr.mxu0 0.0
    %115 = vmatpush1.msra.mxu0 %v44
    %116 = vmatprep.subr.mxu0 0.0
    %117 = vmatpush1.msra.mxu0 0.0
    %118 = vmatprep.subr.mxu0 0.0
    %119 = vmatpush1.msra.mxu0 0.0
    %120 = vmatprep.subr.mxu0 0.0
    %121 = vmatpush1.msra.mxu0 0.0
    %122 = vmatprep.subr.mxu0 0.0
    %123 = vmatpush1.msra.mxu0 0.0
    %124 = vmatprep.subr.mxu0 0.0
    %125 = vmatpush1.msra.mxu0 0.0
    %126 = vmatprep.subr.mxu0 0.0
    %127 = vmatpush1.msra.mxu0 0.0
    %128 = vmatprep.subr.mxu0 0.0
    %129 = vmatpush1.msra.mxu0 0.0
    %130 = vmatprep.subr.mxu0 0.0
    %131 = vmatpush1.msra.mxu0 0.0
    %132 = vmatprep.subr.mxu0 0.0
    %133 = vmatpush1.msra.mxu0 0.0
    %134 = vmatprep.subr.mxu0 0.0
    %135 = vmatpush1.msra.mxu0 0.0
    %136 = vmatprep.subr.mxu0 0.0
    %137 = vmatpush1.msra.mxu0 0.0
    %138 = vmatprep.subr.mxu0 0.0
    %139 = vmatpush1.msra.mxu0 0.0
    %140 = vmatprep.subr.mxu0 0.0
    %141 = vmatpush1.msra.mxu0 0.0
    %142 = vmatprep.subr.mxu0 0.0
    %143 = vmatpush1.msra.mxu0 0.0
    %144 = vmatprep.subr.mxu0 0.0
    %145 = vmatpush1.msra.mxu0 0.0
    %146 = vmatprep.subr.mxu0 0.0
    %147 = vmatpush1.msra.mxu0 0.0
    %148 = vmatprep.mubr.f32.mxu0 0.0
    %149 = vmatmul.mubr.f32.gmra.mrb[0].mxu0 %v45
    %v150 = vpop.f32.mrb[0].mxu0
    %v151 = vadd.f32 0.0, %v150
    %v152 = vpop.f32.mrb[0].mxu0
    %153 = vdwg.mxu0
    %155 = vset.pattern.permute.xlu0 0
    %156 = vperm.xlu0 %155, %v46
    %v157 = vpop.permute.xlu0 %156
    %v159 = vadd.f32 %v157, %v83
    %v160 = vmul.f32 %v151, 2.0
    %v161 = vsub.f32 %v159, %v160
    %v162 = vmax.f32 %v161, 0.0
    %v163 = vrsqrt.pop %v162
    %v164 = vmul.f32 %v162, %v163
    %vm165 = vcmp.eq.f32.partialorder %v162, inf
    %v166 = vsel %vm165, %v162, %v164
    %vm167 = vcmp.eq.f32.partialorder %v162, 0.0
    %v168 = vand.u32 %v162, 2147483648
    %v169 = vsel %vm167, %v168, %v166
    %v170 = vsub.f32 0.0, %v169
    %v171 = vmul.f32 %v170, 0.25
    %v172 = vmul.f32 %v171, 1.442695
    %v173 = vpow.pop %v172
    %v174 = vrot.slane %v173, 4
    %v175 = vadd.f32 %v173, %v174
    %v176 = vrot.slane %v175, 2
    %v177 = vadd.f32 %v175, %v176
    %v178 = vrot.slane %v177, 1
    %v179 = vadd.f32 %v177, %v178
    %v180 = vadd.f32 %v179, 1e-10
    %v181 = vlog2.pop %v180
    %v182 = vmul.f32 %v181, 0.6931472
    %183 = vst [vmem:[#allocation5] sm:$0x1] %v182
    // Predicated region
    $region18: #{tpu_custom_call.1} parent=1 // pred_check
      _
    $region19: #{tpu_custom_call.1} parent=1 // pred_check_branch
      %185 = sbr.rel (0) target = $region21
    $region20: #{tpu_custom_call.1} parent=1 // pred_region
      %s187 = ssub.s32 16, 16
      %188 = vsyncadd [#allocation4], %s187
      %s190 = sshll.u32 [#allocation5], 4
      %s191 = int_to_ptr.vmem [resolvable:$true] %s190
      %193 = dma.vmem_to_hbm [thread:$0]  %s191, 16, %s3, [#allocation4]
    $region21: #{tpu_custom_call.1} parent=1 // pred_fallthru
      _
    // Predicated region
    $region22: #{tpu_custom_call.1} parent=1 // pred_check
      _
    $region23: #{tpu_custom_call.1} parent=1 // pred_check_branch
      %195 = sbr.rel (0) target = $region25
    $region24: #{tpu_custom_call.1} parent=1 // pred_region
      %196 = dma.done [#allocation4], 16
    $region25: #{tpu_custom_call.1} parent=1 // pred_fallthru
      _
    %197 = vsyncpa [#allocation3], 1
    %198 = vsyncpa [#allocation4], 1

</llo_original>
